<compile_context>
chip_gen: v5e
topology: v5e:2x2
jax: 0.10.0
libtpu: 0.0.40
codegen_flags: <defaults>
</compile_context>

<pallas_src>
import functools

import jax
import jax.numpy as jnp
from jax.experimental import pallas as pl
from jax.experimental.pallas import tpu as pltpu


# ---------------------------------------------------------------------------
# shared per-channel math (all operands are (FT, 1) f32)
# ---------------------------------------------------------------------------
def _moments_to_transform(eps, inv_n, s_r, s_i, s_rr, s_ri, s_ii,
                          w_rr, w_ri, w_ii, b_r, b_i):
    mean_r = s_r * inv_n
    mean_i = s_i * inv_n
    V_rr = s_rr * inv_n - mean_r * mean_r + eps
    V_ri = s_ri * inv_n - mean_r * mean_i
    V_ii = s_ii * inv_n - mean_i * mean_i + eps

    # inverse matrix square root of the 2x2 covariance (whitening matrix U)
    tau = V_rr + V_ii
    delta = V_rr * V_ii - V_ri * V_ri
    s = jnp.sqrt(delta)
    t = jnp.sqrt(tau + 2.0 * s)
    crst = (1.0 / (s * t)) * (2.0 ** -0.5)
    U_rr = (s + V_ii) * crst
    U_ii = (s + V_rr) * crst
    U_ri = -V_ri * crst

    # affine: Z = W @ U (W symmetric 2x2 per channel)
    Z_rr = w_rr * U_rr + w_ri * U_ri
    Z_ri = w_rr * U_ri + w_ri * U_ii
    Z_ir = w_ri * U_rr + w_ii * U_ri
    Z_ii = w_ri * U_ri + w_ii * U_ii

    # fold the centering into the bias: Z @ (x - mean) + b == Z @ x + (b - Z @ mean)
    br = b_r - Z_rr * mean_r - Z_ri * mean_i
    bi = b_i - Z_ir * mean_r - Z_ii * mean_i
    return Z_rr, Z_ri, Z_ir, Z_ii, br, bi


def _sum_chan(a):
    # a: (N, FT, HW) f32 -> (FT, 1).  Batch-axis VPU adds first, then a single
    # XLU lane reduce per channel (cuts cross-lane work by a factor of N).
    return jnp.sum(jnp.sum(a, axis=0), axis=-1, keepdims=True)


def _apply_transform(xr, xi, Z_rr, Z_ri, Z_ir, Z_ii, br, bi, y_ref):
    # xr/xi: (N, FT, HW) f32; per-channel terms (FT, 1) broadcast via [None].
    y_ref[:, 0, :, :] = (Z_rr[None] * xr + Z_ri[None] * xi + br[None]).astype(y_ref.dtype)
    y_ref[:, 1, :, :] = (Z_ir[None] * xr + Z_ii[None] * xi + bi[None]).astype(y_ref.dtype)


# ---------------------------------------------------------------------------
# kernels
# ---------------------------------------------------------------------------
def _cbn_fused_kernel(eps, inv_n, x_ref, wrr_ref, wri_ref, wii_ref, b_ref, y_ref):
    # x_ref / y_ref: (N, 2, FT, HWp); W params: (FT, 1); bias: (2, FT, 1).
    xr = x_ref[:, 0, :, :].astype(jnp.float32)
    xi = x_ref[:, 1, :, :].astype(jnp.float32)

    s_r = _sum_chan(xr)
    s_i = _sum_chan(xi)
    s_rr = _sum_chan(xr * xr)
    s_ri = _sum_chan(xr * xi)
    s_ii = _sum_chan(xi * xi)

    Z_rr, Z_ri, Z_ir, Z_ii, br, bi = _moments_to_transform(
        eps, inv_n, s_r, s_i, s_rr, s_ri, s_ii,
        wrr_ref[...], wri_ref[...], wii_ref[...], b_ref[0], b_ref[1])
    _apply_transform(xr, xi, Z_rr, Z_ri, Z_ir, Z_ii, br, bi, y_ref)


def _cbn_moments_kernel(x_ref, mom_ref):
    # x_ref: (N, 2, FT, HWT); mom_ref: (5, FT, 1) accumulator resident across
    # the HW-chunk ("arbitrary") grid axis.
    @pl.when(pl.program_id(1) == 0)
    def _():
        mom_ref[...] = jnp.zeros_like(mom_ref)

    xr = x_ref[:, 0, :, :].astype(jnp.float32)
    xi = x_ref[:, 1, :, :].astype(jnp.float32)
    mom_ref[0] += _sum_chan(xr)
    mom_ref[1] += _sum_chan(xi)
    mom_ref[2] += _sum_chan(xr * xr)
    mom_ref[3] += _sum_chan(xr * xi)
    mom_ref[4] += _sum_chan(xi * xi)


def _cbn_apply_kernel(eps, inv_n, x_ref, mom_ref, wrr_ref, wri_ref, wii_ref, b_ref, y_ref):
    xr = x_ref[:, 0, :, :].astype(jnp.float32)
    xi = x_ref[:, 1, :, :].astype(jnp.float32)
    Z_rr, Z_ri, Z_ir, Z_ii, br, bi = _moments_to_transform(
        eps, inv_n, mom_ref[0], mom_ref[1], mom_ref[2], mom_ref[3], mom_ref[4],
        wrr_ref[...], wri_ref[...], wii_ref[...], b_ref[0], b_ref[1])
    _apply_transform(xr, xi, Z_rr, Z_ri, Z_ir, Z_ii, br, bi, y_ref)


# ---------------------------------------------------------------------------
# chip-aware tiling
# ---------------------------------------------------------------------------
def _vmem_plan():
    """Returns (per-slab budget bytes, vmem_limit_bytes) from the chip's VMEM."""
    try:
        cap = int(pltpu.get_tpu_info().vmem_capacity_bytes)
    except Exception:
        cap = 64 * 1024 * 1024  # conservative default if the query fails
    if cap <= 96 * 1024 * 1024:            # v7x-class: 64 MiB per TensorCore
        return 6 * 1024 * 1024, 56 * 1024 * 1024
    return 12 * 1024 * 1024, 96 * 1024 * 1024   # v5e / v6e: 128 MiB


def _channel_tile_candidates(F):
    cands = [d for d in range(8, F, 8) if F % d == 0]   # multiples of 8 dividing F
    cands.append(F)                                      # full-extent block always legal
    return cands


def _pick_channel_tile(N, F, HW, slab_budget):
    """Largest legal channel tile whose (N,2,FT,HW) slab fits the budget,
    preferring an even grid length >= 2 (v7x megacore / pipeline overlap).
    Returns None if even the smallest legal tile does not fit (-> two-pass)."""
    def slab_bytes(ft):
        return N * 2 * ft * HW * 4          # conservative f32 footprint

    fitting = [ft for ft in _channel_tile_candidates(F) if slab_bytes(ft) <= slab_budget]
    if not fitting:
        return None
    min_split = 1 * 1024 * 1024             # only split if slabs stay >= 1 MiB
    even = [ft for ft in fitting if (F // ft) >= 2 and (F // ft) % 2 == 0
            and slab_bytes(ft) >= min_split]
    multi = [ft for ft in fitting if (F // ft) >= 2 and slab_bytes(ft) >= min_split]
    for pool in (even, multi, fitting):
        if pool:
            return max(pool)
    return max(fitting)


def _pick_hw_tile(N, FT, HW_pad, slab_budget):
    """Largest 128-multiple divisor of HW_pad whose chunk fits the budget."""
    def slab_bytes(hwt):
        return N * 2 * FT * hwt * 4
    best = 128
    for hwt in range(128, HW_pad + 1, 128):
        if HW_pad % hwt == 0 and slab_bytes(hwt) <= slab_budget:
            best = hwt
    return best


# ---------------------------------------------------------------------------
# wrapper
# ---------------------------------------------------------------------------
def complex_batch_norm(x, W_rr, W_ri, W_ii, bias, eps=5e-6, *, _slab_budget_override=None):
    """x: (N, 2F, H, W).  Training-mode batch statistics.  Returns same shape/dtype."""
    N, C, H, W = x.shape
    F = C // 2
    HW = H * W

    slab_budget, vmem_limit = _vmem_plan()
    if _slab_budget_override is not None:
        slab_budget = _slab_budget_override

    # Free reshape: channel axis splits as (2, F) => real half / imag half.
    x4 = x.reshape(N, 2, F, HW)

    # Lane-dense last dim: pad H*W up to a multiple of 128 with zeros.  Raw
    # moments are exact under zero padding (inv_n uses the true count); the
    # padded output columns are sliced away afterwards.
    HW_pad = ((HW + 127) // 128) * 128
    if HW_pad != HW:
        x4 = jnp.pad(x4, ((0, 0), (0, 0), (0, 0), (0, HW_pad - HW)))

    wrr = W_rr.reshape(F, 1).astype(jnp.float32)
    wri = W_ri.reshape(F, 1).astype(jnp.float32)
    wii = W_ii.reshape(F, 1).astype(jnp.float32)
    b2 = bias.reshape(2, F, 1).astype(jnp.float32)   # row 0: real bias, row 1: imag bias

    inv_n = 1.0 / float(N * HW)                      # true count, independent of tiling/padding

    FT = _pick_channel_tile(N, F, HW_pad, slab_budget)

    if FT is not None:
        # ---- fused single-sweep path: x read once, y written once ----
        x_spec = pl.BlockSpec((N, 2, FT, HW_pad), lambda i: (0, 0, i, 0))
        w_spec = pl.BlockSpec((FT, 1), lambda i: (i, 0))
        b_spec = pl.BlockSpec((2, FT, 1), lambda i: (0, i, 0))
        y = pl.pallas_call(
            functools.partial(_cbn_fused_kernel, eps, inv_n),
            out_shape=jax.ShapeDtypeStruct((N, 2, F, HW_pad), x.dtype),
            grid=(F // FT,),
            in_specs=[x_spec, w_spec, w_spec, w_spec, b_spec],
            out_specs=x_spec,
            compiler_params=pltpu.CompilerParams(
                dimension_semantics=("parallel",),
                vmem_limit_bytes=vmem_limit),
        )(x4, wrr, wri, wii, b2)
    else:
        # ---- two-pass fallback for very large N*H*W per channel ----
        FT = 8 if (F % 8 == 0 and F >= 8) else F
        HWT = _pick_hw_tile(N, FT, HW_pad, slab_budget)
        n_hw = HW_pad // HWT

        x_spec = pl.BlockSpec((N, 2, FT, HWT), lambda i, j: (0, 0, i, j))
        mom_spec = pl.BlockSpec((5, FT, 1), lambda i, j: (0, i, 0))
        w_spec = pl.BlockSpec((FT, 1), lambda i, j: (i, 0))
        b_spec = pl.BlockSpec((2, FT, 1), lambda i, j: (0, i, 0))

        mom = pl.pallas_call(
            _cbn_moments_kernel,
            out_shape=jax.ShapeDtypeStruct((5, F, 1), jnp.float32),
            grid=(F // FT, n_hw),
            in_specs=[x_spec],
            out_specs=mom_spec,
            compiler_params=pltpu.CompilerParams(
                dimension_semantics=("parallel", "arbitrary"),
                vmem_limit_bytes=vmem_limit),
        )(x4)

        y = pl.pallas_call(
            functools.partial(_cbn_apply_kernel, eps, inv_n),
            out_shape=jax.ShapeDtypeStruct((N, 2, F, HW_pad), x.dtype),
            grid=(F // FT, n_hw),
            in_specs=[x_spec, mom_spec, w_spec, w_spec, w_spec, b_spec],
            out_specs=x_spec,
            compiler_params=pltpu.CompilerParams(
                dimension_semantics=("parallel", "parallel"),
                vmem_limit_bytes=vmem_limit),
        )(x4, mom, wrr, wri, wii, b2)

    if HW_pad != HW:
        y = y[..., :HW]
    return y.reshape(N, C, H, W)


# ---------------------------------------------------------------------------
# pure-JAX reference mirroring the PyTorch forward (training mode)
# ---------------------------------------------------------------------------
def _reference(x, W_rr, W_ri, W_ii, bias, eps=5e-6):
    N, C, H, W = x.shape
    F = C // 2
    mean = jnp.mean(x, axis=(0, 2, 3), keepdims=True)
    x = x - mean
    x_r, x_i = x[:, :F], x[:, F:]
    V_rr = jnp.mean(x_r ** 2, axis=(0, 2, 3), keepdims=True) + eps
    V_ri = jnp.mean(x_r * x_i, axis=(0, 2, 3), keepdims=True)
    V_ii = jnp.mean(x_i ** 2, axis=(0, 2, 3), keepdims=True) + eps
    tau = V_rr + V_ii
    delta = V_rr * V_ii - V_ri * V_ri
    s = jnp.sqrt(delta)
    t = jnp.sqrt(tau + 2 * s)
    crst = (1.0 / (s * t)) * (2.0 ** -0.5)
    U_rr = (s + V_ii) * crst
    U_ii = (s + V_rr) * crst
    U_ri = -V_ri * crst
    w_rr = W_rr.reshape(1, F, 1, 1)
    w_ri = W_ri.reshape(1, F, 1, 1)
    w_ii = W_ii.reshape(1, F, 1, 1)
    Z_rr = w_rr * U_rr + w_ri * U_ri
    Z_ri = w_rr * U_ri + w_ri * U_ii
    Z_ir = w_ri * U_rr + w_ii * U_ri
    Z_ii = w_ri * U_ri + w_ii * U_ii
    y_r = Z_rr * x_r + Z_ri * x_i
    y_i = Z_ir * x_r + Z_ii * x_i
    y = jnp.concatenate([y_r, y_i], axis=1)
    return y + bias.reshape(1, 2 * F, 1, 1)


if __name__ == "__main__":
    num_features = 4                          # F
    N, C, H, W = 2, 2 * num_features, 16, 16  # input channel dim = 2*F

    key = jax.random.PRNGKey(0)
    k1, k2, k3, k4, k5, k6 = jax.random.split(key, 6)
    x = jax.random.normal(k1, (N, C, H, W), dtype=jnp.float32)

    # Non-trivial affine parameters (deterministic) to exercise the full 2x2 math.
    W_rr = 1.0 + 0.1 * jax.random.normal(k2, (num_features,), jnp.float32)
    W_ii = 1.0 + 0.1 * jax.random.normal(k3, (num_features,), jnp.float32)
    W_ri = 0.1 * jax.random.normal(k4, (num_features,), jnp.float32)
    bias = 0.1 * jax.random.normal(k5, (2 * num_features,), jnp.float32)

    # 1) fused single-sweep path
    y = complex_batch_norm(x, W_rr, W_ri, W_ii, bias)
    y = jax.block_until_ready(y)
    y_ref = _reference(x, W_rr, W_ri, W_ii, bias)
    assert y.shape == (N, C, H, W)
    assert jnp.allclose(y, y_ref, atol=1e-4, rtol=1e-4), float(jnp.max(jnp.abs(y - y_ref)))

    # 2) two-pass (moments + apply) fallback path, forced via a tiny slab budget
    y2 = complex_batch_norm(x, W_rr, W_ri, W_ii, bias, _slab_budget_override=1024)
    y2 = jax.block_until_ready(y2)
    assert jnp.allclose(y2, y_ref, atol=1e-4, rtol=1e-4), float(jnp.max(jnp.abs(y2 - y_ref)))

    # 3) non-128-aligned spatial size exercises the lane-padding path
    x3 = jax.random.normal(k6, (N, C, 10, 10), dtype=jnp.float32)
    y3 = complex_batch_norm(x3, W_rr, W_ri, W_ii, bias)
    y3 = jax.block_until_ready(y3)
    y3_ref = _reference(x3, W_rr, W_ri, W_ii, bias)
    assert y3.shape == x3.shape
    assert jnp.allclose(y3, y3_ref, atol=1e-4, rtol=1e-4), float(jnp.max(jnp.abs(y3 - y3_ref)))

    print("KERNEL_OK")
</pallas_src>

<mosaic_0001>
module attributes {stable_mosaic.version = 11 : i64} {
  func.func @_cbn_fused_kernel(%arg0: i32, %arg1: memref<2x2x4x256xf32, #tpu.memory_space<vmem>>, %arg2: memref<4x1xf32, #tpu.memory_space<vmem>>, %arg3: memref<4x1xf32, #tpu.memory_space<vmem>>, %arg4: memref<4x1xf32, #tpu.memory_space<vmem>>, %arg5: memref<2x4x1xf32, #tpu.memory_space<vmem>>, %arg6: memref<2x2x4x256xf32, #tpu.memory_space<vmem>>) attributes {dimension_semantics = [#tpu.dimension_semantics<parallel>], iteration_bounds = array<i64: 1>, scalar_prefetch = 0 : i64, scratch_operands = 0 : i64, tpu.core_type = #tpu.core_type<tc>, window_params = [{transform_indices = @transform_0, window_bounds = array<i64: 2, 2, 4, 256>}, {transform_indices = @transform_1, window_bounds = array<i64: 4, 1>}, {transform_indices = @transform_2, window_bounds = array<i64: 4, 1>}, {transform_indices = @transform_3, window_bounds = array<i64: 4, 1>}, {transform_indices = @transform_4, window_bounds = array<i64: 2, 4, 1>}, {transform_indices = @transform_5, window_bounds = array<i64: 2, 2, 4, 256>}]} {
    %c0 = arith.constant 0 : index
    %c0_0 = arith.constant 0 : index
    %c0_1 = arith.constant 0 : index
    %c0_2 = arith.constant 0 : index
    %0 = vector.load %arg1[%c0, %c0_0, %c0_1, %c0_2] : memref<2x2x4x256xf32, #tpu.memory_space<vmem>>, vector<2x1x4x256xf32>
    %1 = vector.shape_cast %0 : vector<2x1x4x256xf32> to vector<2x4x256xf32>
    %c0_3 = arith.constant 0 : index
    %c1 = arith.constant 1 : index
    %c0_4 = arith.constant 0 : index
    %c0_5 = arith.constant 0 : index
    %2 = vector.load %arg1[%c0_3, %c1, %c0_4, %c0_5] : memref<2x2x4x256xf32, #tpu.memory_space<vmem>>, vector<2x1x4x256xf32>
    %3 = vector.shape_cast %2 : vector<2x1x4x256xf32> to vector<2x4x256xf32>
    %cst = arith.constant dense<0.000000e+00> : vector<4x256xf32>
    %4 = vector.multi_reduction <add>, %1, %cst [0] : vector<2x4x256xf32> to vector<4x256xf32>
    %cst_6 = arith.constant dense<0.000000e+00> : vector<4xf32>
    %5 = vector.multi_reduction <add>, %4, %cst_6 [1] : vector<4x256xf32> to vector<4xf32>
    %6 = vector.shape_cast %5 : vector<4xf32> to vector<4x1xf32>
    %cst_7 = arith.constant dense<0.000000e+00> : vector<4x256xf32>
    %7 = vector.multi_reduction <add>, %3, %cst_7 [0] : vector<2x4x256xf32> to vector<4x256xf32>
    %cst_8 = arith.constant dense<0.000000e+00> : vector<4xf32>
    %8 = vector.multi_reduction <add>, %7, %cst_8 [1] : vector<4x256xf32> to vector<4xf32>
    %9 = vector.shape_cast %8 : vector<4xf32> to vector<4x1xf32>
    %10 = arith.mulf %1, %1 : vector<2x4x256xf32>
    %cst_9 = arith.constant dense<0.000000e+00> : vector<4x256xf32>
    %11 = vector.multi_reduction <add>, %10, %cst_9 [0] : vector<2x4x256xf32> to vector<4x256xf32>
    %cst_10 = arith.constant dense<0.000000e+00> : vector<4xf32>
    %12 = vector.multi_reduction <add>, %11, %cst_10 [1] : vector<4x256xf32> to vector<4xf32>
    %13 = vector.shape_cast %12 : vector<4xf32> to vector<4x1xf32>
    %14 = arith.mulf %1, %3 : vector<2x4x256xf32>
    %cst_11 = arith.constant dense<0.000000e+00> : vector<4x256xf32>
    %15 = vector.multi_reduction <add>, %14, %cst_11 [0] : vector<2x4x256xf32> to vector<4x256xf32>
    %cst_12 = arith.constant dense<0.000000e+00> : vector<4xf32>
    %16 = vector.multi_reduction <add>, %15, %cst_12 [1] : vector<4x256xf32> to vector<4xf32>
    %17 = vector.shape_cast %16 : vector<4xf32> to vector<4x1xf32>
    %18 = arith.mulf %3, %3 : vector<2x4x256xf32>
    %cst_13 = arith.constant dense<0.000000e+00> : vector<4x256xf32>
    %19 = vector.multi_reduction <add>, %18, %cst_13 [0] : vector<2x4x256xf32> to vector<4x256xf32>
    %cst_14 = arith.constant dense<0.000000e+00> : vector<4xf32>
    %20 = vector.multi_reduction <add>, %19, %cst_14 [1] : vector<4x256xf32> to vector<4xf32>
    %21 = vector.shape_cast %20 : vector<4xf32> to vector<4x1xf32>
    %c0_15 = arith.constant 0 : index
    %c0_16 = arith.constant 0 : index
    %22 = vector.load %arg2[%c0_15, %c0_16] : memref<4x1xf32, #tpu.memory_space<vmem>>, vector<4x1xf32>
    %c0_17 = arith.constant 0 : index
    %c0_18 = arith.constant 0 : index
    %23 = vector.load %arg3[%c0_17, %c0_18] : memref<4x1xf32, #tpu.memory_space<vmem>>, vector<4x1xf32>
    %c0_19 = arith.constant 0 : index
    %c0_20 = arith.constant 0 : index
    %24 = vector.load %arg4[%c0_19, %c0_20] : memref<4x1xf32, #tpu.memory_space<vmem>>, vector<4x1xf32>
    %c0_21 = arith.constant 0 : index
    %c0_22 = arith.constant 0 : index
    %c0_23 = arith.constant 0 : index
    %25 = vector.load %arg5[%c0_21, %c0_22, %c0_23] : memref<2x4x1xf32, #tpu.memory_space<vmem>>, vector<1x4x1xf32>
    %26 = vector.shape_cast %25 : vector<1x4x1xf32> to vector<4x1xf32>
    %c1_24 = arith.constant 1 : index
    %c0_25 = arith.constant 0 : index
    %c0_26 = arith.constant 0 : index
    %27 = vector.load %arg5[%c1_24, %c0_25, %c0_26] : memref<2x4x1xf32, #tpu.memory_space<vmem>>, vector<1x4x1xf32>
    %28 = vector.shape_cast %27 : vector<1x4x1xf32> to vector<4x1xf32>
    %cst_27 = arith.constant 0.001953125 : f32
    %29 = vector.broadcast %cst_27 : f32 to vector<4x1xf32>
    %30 = arith.mulf %6, %29 : vector<4x1xf32>
    %cst_28 = arith.constant 0.001953125 : f32
    %31 = vector.broadcast %cst_28 : f32 to vector<4x1xf32>
    %32 = arith.mulf %9, %31 : vector<4x1xf32>
    %cst_29 = arith.constant 0.001953125 : f32
    %33 = vector.broadcast %cst_29 : f32 to vector<4x1xf32>
    %34 = arith.mulf %13, %33 : vector<4x1xf32>
    %35 = arith.mulf %30, %30 : vector<4x1xf32>
    %36 = arith.subf %34, %35 : vector<4x1xf32>
    %cst_30 = arith.constant 5.000000e-06 : f32
    %37 = vector.broadcast %cst_30 : f32 to vector<4x1xf32>
    %38 = arith.addf %36, %37 : vector<4x1xf32>
    %cst_31 = arith.constant 0.001953125 : f32
    %39 = vector.broadcast %cst_31 : f32 to vector<4x1xf32>
    %40 = arith.mulf %17, %39 : vector<4x1xf32>
    %41 = arith.mulf %30, %32 : vector<4x1xf32>
    %42 = arith.subf %40, %41 : vector<4x1xf32>
    %cst_32 = arith.constant 0.001953125 : f32
    %43 = vector.broadcast %cst_32 : f32 to vector<4x1xf32>
    %44 = arith.mulf %21, %43 : vector<4x1xf32>
    %45 = arith.mulf %32, %32 : vector<4x1xf32>
    %46 = arith.subf %44, %45 : vector<4x1xf32>
    %cst_33 = arith.constant 5.000000e-06 : f32
    %47 = vector.broadcast %cst_33 : f32 to vector<4x1xf32>
    %48 = arith.addf %46, %47 : vector<4x1xf32>
    %49 = arith.addf %38, %48 : vector<4x1xf32>
    %50 = arith.mulf %38, %48 : vector<4x1xf32>
    %51 = arith.mulf %42, %42 : vector<4x1xf32>
    %52 = arith.subf %50, %51 : vector<4x1xf32>
    %53 = math.sqrt %52 : vector<4x1xf32>
    %cst_34 = arith.constant 2.000000e+00 : f32
    %54 = vector.broadcast %cst_34 : f32 to vector<4x1xf32>
    %55 = arith.mulf %54, %53 : vector<4x1xf32>
    %56 = arith.addf %49, %55 : vector<4x1xf32>
    %57 = math.sqrt %56 : vector<4x1xf32>
    %58 = arith.mulf %53, %57 : vector<4x1xf32>
    %cst_35 = arith.constant 1.000000e+00 : f32
    %59 = vector.broadcast %cst_35 : f32 to vector<4x1xf32>
    %60 = arith.divf %59, %58 : vector<4x1xf32>
    %cst_36 = arith.constant 0.707106769 : f32
    %61 = vector.broadcast %cst_36 : f32 to vector<4x1xf32>
    %62 = arith.mulf %60, %61 : vector<4x1xf32>
    %63 = arith.addf %53, %48 : vector<4x1xf32>
    %64 = arith.mulf %63, %62 : vector<4x1xf32>
    %65 = arith.addf %53, %38 : vector<4x1xf32>
    %66 = arith.mulf %65, %62 : vector<4x1xf32>
    %cst_37 = arith.constant 0.000000e+00 : f32
    %67 = vector.broadcast %cst_37 : f32 to vector<4x1xf32>
    %68 = arith.subf %67, %42 : vector<4x1xf32>
    %69 = arith.mulf %68, %62 : vector<4x1xf32>
    %70 = arith.mulf %22, %64 : vector<4x1xf32>
    %71 = arith.mulf %23, %69 : vector<4x1xf32>
    %72 = arith.addf %70, %71 : vector<4x1xf32>
    %73 = arith.mulf %22, %69 : vector<4x1xf32>
    %74 = arith.mulf %23, %66 : vector<4x1xf32>
    %75 = arith.addf %73, %74 : vector<4x1xf32>
    %76 = arith.mulf %23, %64 : vector<4x1xf32>
    %77 = arith.mulf %24, %69 : vector<4x1xf32>
    %78 = arith.addf %76, %77 : vector<4x1xf32>
    %79 = arith.mulf %23, %69 : vector<4x1xf32>
    %80 = arith.mulf %24, %66 : vector<4x1xf32>
    %81 = arith.addf %79, %80 : vector<4x1xf32>
    %82 = arith.mulf %72, %30 : vector<4x1xf32>
    %83 = arith.subf %26, %82 : vector<4x1xf32>
    %84 = arith.mulf %75, %32 : vector<4x1xf32>
    %85 = arith.subf %83, %84 : vector<4x1xf32>
    %86 = arith.mulf %78, %30 : vector<4x1xf32>
    %87 = arith.subf %28, %86 : vector<4x1xf32>
    %88 = arith.mulf %81, %32 : vector<4x1xf32>
    %89 = arith.subf %87, %88 : vector<4x1xf32>
    %90 = vector.shape_cast %72 : vector<4x1xf32> to vector<1x4x1xf32>
    %91 = vector.broadcast %90 : vector<1x4x1xf32> to vector<2x4x256xf32>
    %92 = arith.mulf %91, %1 : vector<2x4x256xf32>
    %93 = vector.shape_cast %75 : vector<4x1xf32> to vector<1x4x1xf32>
    %94 = vector.broadcast %93 : vector<1x4x1xf32> to vector<2x4x256xf32>
    %95 = arith.mulf %94, %3 : vector<2x4x256xf32>
    %96 = arith.addf %92, %95 : vector<2x4x256xf32>
    %97 = vector.shape_cast %85 : vector<4x1xf32> to vector<1x4x1xf32>
    %98 = vector.broadcast %97 : vector<1x4x1xf32> to vector<2x4x256xf32>
    %99 = arith.addf %96, %98 : vector<2x4x256xf32>
    %c0_38 = arith.constant 0 : index
    %c0_39 = arith.constant 0 : index
    %c0_40 = arith.constant 0 : index
    %c0_41 = arith.constant 0 : index
    %100 = vector.load %arg6[%c0_38, %c0_39, %c0_40, %c0_41] : memref<2x2x4x256xf32, #tpu.memory_space<vmem>>, vector<2x1x4x256xf32>
    %101 = vector.shape_cast %100 : vector<2x1x4x256xf32> to vector<2x4x256xf32>
    %102 = vector.shape_cast %99 : vector<2x4x256xf32> to vector<2x1x4x256xf32>
    tpu.vector_store %arg6[%c0_38, %c0_39, %c0_40, %c0_41], %102 {strides = array<i32>} : memref<2x2x4x256xf32, #tpu.memory_space<vmem>>, vector<2x1x4x256xf32>,
    %103 = vector.shape_cast %78 : vector<4x1xf32> to vector<1x4x1xf32>
    %104 = vector.broadcast %103 : vector<1x4x1xf32> to vector<2x4x256xf32>
    %105 = arith.mulf %104, %1 : vector<2x4x256xf32>
    %106 = vector.shape_cast %81 : vector<4x1xf32> to vector<1x4x1xf32>
    %107 = vector.broadcast %106 : vector<1x4x1xf32> to vector<2x4x256xf32>
    %108 = arith.mulf %107, %3 : vector<2x4x256xf32>
    %109 = arith.addf %105, %108 : vector<2x4x256xf32>
    %110 = vector.shape_cast %89 : vector<4x1xf32> to vector<1x4x1xf32>
    %111 = vector.broadcast %110 : vector<1x4x1xf32> to vector<2x4x256xf32>
    %112 = arith.addf %109, %111 : vector<2x4x256xf32>
    %c0_42 = arith.constant 0 : index
    %c1_43 = arith.constant 1 : index
    %c0_44 = arith.constant 0 : index
    %c0_45 = arith.constant 0 : index
    %113 = vector.load %arg6[%c0_42, %c1_43, %c0_44, %c0_45] : memref<2x2x4x256xf32, #tpu.memory_space<vmem>>, vector<2x1x4x256xf32>
    %114 = vector.shape_cast %113 : vector<2x1x4x256xf32> to vector<2x4x256xf32>
    %115 = vector.shape_cast %112 : vector<2x4x256xf32> to vector<2x1x4x256xf32>
    tpu.vector_store %arg6[%c0_42, %c1_43, %c0_44, %c0_45], %115 {strides = array<i32>} : memref<2x2x4x256xf32, #tpu.memory_space<vmem>>, vector<2x1x4x256xf32>,
    return
  }
  func.func @transform_0(%arg0: i32) -> (i32, i32, i32, i32) {
    %c0_i32 = arith.constant 0 : i32
    %c0_i32_0 = arith.constant 0 : i32
    %c0_i32_1 = arith.constant 0 : i32
    %c0_i32_2 = arith.constant 0 : i32
    return %c0_i32, %c0_i32_0, %arg0, %c0_i32_1 : i32, i32, i32, i32
  }
  func.func @transform_1(%arg0: i32) -> (i32, i32) {
    %c0_i32 = arith.constant 0 : i32
    %c0_i32_0 = arith.constant 0 : i32
    return %arg0, %c0_i32 : i32, i32
  }
  func.func @transform_2(%arg0: i32) -> (i32, i32) {
    %c0_i32 = arith.constant 0 : i32
    %c0_i32_0 = arith.constant 0 : i32
    return %arg0, %c0_i32 : i32, i32
  }
  func.func @transform_3(%arg0: i32) -> (i32, i32) {
    %c0_i32 = arith.constant 0 : i32
    %c0_i32_0 = arith.constant 0 : i32
    return %arg0, %c0_i32 : i32, i32
  }
  func.func @transform_4(%arg0: i32) -> (i32, i32, i32) {
    %c0_i32 = arith.constant 0 : i32
    %c0_i32_0 = arith.constant 0 : i32
    %c0_i32_1 = arith.constant 0 : i32
    return %c0_i32, %arg0, %c0_i32_0 : i32, i32, i32
  }
  func.func @transform_5(%arg0: i32) -> (i32, i32, i32, i32) {
    %c0_i32 = arith.constant 0 : i32
    %c0_i32_0 = arith.constant 0 : i32
    %c0_i32_1 = arith.constant 0 : i32
    %c0_i32_2 = arith.constant 0 : i32
    return %c0_i32, %c0_i32_0, %arg0, %c0_i32_1 : i32, i32, i32, i32
  }
}

</mosaic_0001>

<llo_original>
// kernel: tpu_custom_call.1
$region0: #{tpu_custom_call.1}
  #allocation0 [shape = 'u32[]', space=smem, size = 0x4, offset = 0x4, fixed_abs, tag = 'smem constant byte address 0x4 - core index']
  #allocation1 [shape = 'u32[72,128]{1,0:T(1,128)}', space=vmem, size = 0x9000, scoped, tag = 'internal scratch']
  %s0 = inlined_call_operand.hbm [shape: f32[2,2,4,256], index: 0, kind: input, shape index: {}]
  %s1 = inlined_call_operand.vmem [shape: f32[4,1], index: 1, kind: input, shape index: {}]
  %s2 = inlined_call_operand.vmem [shape: f32[4,1], index: 2, kind: input, shape index: {}]
  %s3 = inlined_call_operand.vmem [shape: f32[4,1], index: 3, kind: input, shape index: {}]
  %s4 = inlined_call_operand.vmem [shape: f32[2,4,1], index: 4, kind: input, shape index: {}]
  %s5 = inlined_call_operand.hbm [shape: f32[2,2,4,256], index: 5, kind: output, shape index: {}]
  %s6 = sld [smem:[#allocation0]]
  $region34: #{tpu_custom_call.1} parent=0
    _
  %s8 = ssub.s32 1, %s6
  %s9 = scalar_select 0, %s8, %s6
  $region1: #{tpu_custom_call.1} parent=0
    #allocation2 [shape = 'u8[16384]{0}', space=vmem, size = 0x4000, scoped, tag = 'input window, operand 0, single buffered']
    #allocation3 [shape = 's32[1]{0}', space=sflag, size = 0x4, scoped, tag = 'scoped memory for tpu_custom_call.1']
    #allocation4 [shape = 's32[1]{0}', space=sflag, size = 0x4, scoped, tag = 'scoped memory for tpu_custom_call.1']
    #allocation5 [shape = 'u8[16384]{0}', space=vmem, size = 0x4000, scoped, tag = 'output window, operand 0, single buffered']
    %10 = vsyncpa [#allocation3], 0
    %11 = vsyncpa [#allocation4], 0
    // Predicated region
    $region2: #{tpu_custom_call.1} parent=1 // pred_check
      _
    $region3: #{tpu_custom_call.1} parent=1 // pred_check_branch
      %13 = sbr.rel (0) target = $region5
    $region4: #{tpu_custom_call.1} parent=1 // pred_region
      %15 = vsyncadd [#allocation3], 0
      %s16 = sshll.u32 %s0, 4
      %s17 = int_to_ptr.hbm [resolvable:$true] %s16
      %s18 = sshll.u32 [#allocation2], 4
      %s19 = int_to_ptr.vmem [resolvable:$true] %s18
      %24 = dma.hbm_to_vmem [thread:$0]  %s17, 512, %s19, [#allocation3], 128, 128, 8
    $region5: #{tpu_custom_call.1} parent=1 // pred_fallthru
      _
    // Predicated region
    $region6: #{tpu_custom_call.1} parent=1 // pred_check
      _
    $region7: #{tpu_custom_call.1} parent=1 // pred_check_branch
      %26 = sbr.rel (0) target = $region9
    $region8: #{tpu_custom_call.1} parent=1 // pred_region
      _
    $region9: #{tpu_custom_call.1} parent=1 // pred_fallthru
      _
    // Predicated region
    $region10: #{tpu_custom_call.1} parent=1 // pred_check
      _
    $region11: #{tpu_custom_call.1} parent=1 // pred_check_branch
      %28 = sbr.rel (0) target = $region13
    $region12: #{tpu_custom_call.1} parent=1 // pred_region
      _
    $region13: #{tpu_custom_call.1} parent=1 // pred_fallthru
      _
    // Predicated region
    $region14: #{tpu_custom_call.1} parent=1 // pred_check
      _
    $region15: #{tpu_custom_call.1} parent=1 // pred_check_branch
      %30 = sbr.rel (0) target = $region17
    $region16: #{tpu_custom_call.1} parent=1 // pred_region
      _
    $region17: #{tpu_custom_call.1} parent=1 // pred_fallthru
      _
    // Predicated region
    $region18: #{tpu_custom_call.1} parent=1 // pred_check
      _
    $region19: #{tpu_custom_call.1} parent=1 // pred_check_branch
      %32 = sbr.rel (0) target = $region21
    $region20: #{tpu_custom_call.1} parent=1 // pred_region
      _
    $region21: #{tpu_custom_call.1} parent=1 // pred_fallthru
      _
    // Predicated region
    $region22: #{tpu_custom_call.1} parent=1 // pred_check
      _
    $region23: #{tpu_custom_call.1} parent=1 // pred_check_branch
      %34 = sbr.rel (0) target = $region25
    $region24: #{tpu_custom_call.1} parent=1 // pred_region
      %36 = dma.done [#allocation3], 512
    $region25: #{tpu_custom_call.1} parent=1 // pred_fallthru
      _
    %v37 = vld [vmem:[#allocation2] sm:$0xff]
    %v38 = vld [vmem:[#allocation2 + $0x10] sm:$0xff]
    %s39 = scalar_lea.vmem [#allocation2], 8
    %v40 = vld [vmem:[%s39] sm:$0xff]
    %v41 = vld [vmem:[%s39 + $0x10] sm:$0xff]
    %44 = vst [vmem:[#allocation1] ss:$2 sm:$0xff] %v37
    %v45 = vld.sshfl [vmem:[#allocation1] sm:$0xff pattern:$0x75316420]
    %v46 = vld.sshfl [vmem:[#allocation1 + $0x8] sm:$0xff pattern:$0x75316420]
    %s47 = scalar_lea.vmem [#allocation1], 16
    %48 = vst [vmem:[%s47] ss:$2 sm:$0xff] %v38
    %v49 = vld.sshfl [vmem:[#allocation1 + $0x10] sm:$0xff pattern:$0x75316420]
    %v50 = vld.sshfl [vmem:[#allocation1 + $0x18] sm:$0xff pattern:$0x75316420]
    %vm55 = vcmask 1043456
    %v56 = vsel %vm55, %v45, 0.0
    %v57 = vsel %vm55, %v49, 0.0
    %v58 = vadd.f32 %v56, %v57
    %v59 = vsel %vm55, %v46, 0.0
    %v60 = vsel %vm55, %v50, 0.0
    %v61 = vadd.f32 %v59, %v60
    %v62 = vsel %vm55, %v58, 0.0
    %v63 = vsel %vm55, %v61, 0.0
    %v64 = vadd.f32 %v62, %v63
    %65 = vadd.xlane.f32.xlu0 %v64
    %v66 = vpop.xlane.xlu0 %65
    %69 = vst [vmem:[#allocation1] ss:$2 sm:$0xff] %v40
    %v70 = vld.sshfl [vmem:[#allocation1] sm:$0xff pattern:$0x75316420]
    %v71 = vld.sshfl [vmem:[#allocation1 + $0x8] sm:$0xff pattern:$0x75316420]
    %s72 = scalar_lea.vmem [#allocation1], 16
    %73 = vst [vmem:[%s72] ss:$2 sm:$0xff] %v41
    %v74 = vld.sshfl [vmem:[#allocation1 + $0x10] sm:$0xff pattern:$0x75316420]
    %v75 = vld.sshfl [vmem:[#allocation1 + $0x18] sm:$0xff pattern:$0x75316420]
    %v80 = vsel %vm55, %v70, 0.0
    %v81 = vsel %vm55, %v74, 0.0
    %v82 = vadd.f32 %v80, %v81
    %v83 = vsel %vm55, %v71, 0.0
    %v84 = vsel %vm55, %v75, 0.0
    %v85 = vadd.f32 %v83, %v84
    %v86 = vsel %vm55, %v82, 0.0
    %v87 = vsel %vm55, %v85, 0.0
    %v88 = vadd.f32 %v86, %v87
    %89 = vadd.xlane.f32.xlu0 %v88
    %v90 = vpop.xlane.xlu0 %89
    %v91 = vmul.f32 %v37, %v37
    %v92 = vmul.f32 %v38, %v38
    %95 = vst [vmem:[#allocation1] ss:$2 sm:$0xff] %v91
    %v96 = vld.sshfl [vmem:[#allocation1] sm:$0xff pattern:$0x75316420]
    %v97 = vld.sshfl [vmem:[#allocation1 + $0x8] sm:$0xff pattern:$0x75316420]
    %s98 = scalar_lea.vmem [#allocation1], 16
    %99 = vst [vmem:[%s98] ss:$2 sm:$0xff] %v92
    %v100 = vld.sshfl [vmem:[#allocation1 + $0x10] sm:$0xff pattern:$0x75316420]
    %v101 = vld.sshfl [vmem:[#allocation1 + $0x18] sm:$0xff pattern:$0x75316420]
    %v106 = vsel %vm55, %v96, 0.0
    %v107 = vsel %vm55, %v100, 0.0
    %v108 = vadd.f32 %v106, %v107
    %v109 = vsel %vm55, %v97, 0.0
    %v110 = vsel %vm55, %v101, 0.0
    %v111 = vadd.f32 %v109, %v110
    %v112 = vsel %vm55, %v108, 0.0
    %v113 = vsel %vm55, %v111, 0.0
    %v114 = vadd.f32 %v112, %v113
    %115 = vadd.xlane.f32.xlu0 %v114
    %v116 = vpop.xlane.xlu0 %115
    %v117 = vmul.f32 %v37, %v40
    %v118 = vmul.f32 %v38, %v41
    %121 = vst [vmem:[#allocation1] ss:$2 sm:$0xff] %v117
    %v122 = vld.sshfl [vmem:[#allocation1] sm:$0xff pattern:$0x75316420]
    %v123 = vld.sshfl [vmem:[#allocation1 + $0x8] sm:$0xff pattern:$0x75316420]
    %s124 = scalar_lea.vmem [#allocation1], 16
    %125 = vst [vmem:[%s124] ss:$2 sm:$0xff] %v118
    %v126 = vld.sshfl [vmem:[#allocation1 + $0x10] sm:$0xff pattern:$0x75316420]
    %v127 = vld.sshfl [vmem:[#allocation1 + $0x18] sm:$0xff pattern:$0x75316420]
    %v132 = vsel %vm55, %v122, 0.0
    %v133 = vsel %vm55, %v126, 0.0
    %v134 = vadd.f32 %v132, %v133
    %v135 = vsel %vm55, %v123, 0.0
    %v136 = vsel %vm55, %v127, 0.0
    %v137 = vadd.f32 %v135, %v136
    %v138 = vsel %vm55, %v134, 0.0
    %v139 = vsel %vm55, %v137, 0.0
    %v140 = vadd.f32 %v138, %v139
    %141 = vadd.xlane.f32.xlu0 %v140
    %v142 = vpop.xlane.xlu0 %141
    %v143 = vmul.f32 %v40, %v40
    %v144 = vmul.f32 %v41, %v41
    %147 = vst [vmem:[#allocation1] ss:$2 sm:$0xff] %v143
    %v148 = vld.sshfl [vmem:[#allocation1] sm:$0xff pattern:$0x75316420]
    %v149 = vld.sshfl [vmem:[#allocation1 + $0x8] sm:$0xff pattern:$0x75316420]
    %s150 = scalar_lea.vmem [#allocation1], 16
    %151 = vst [vmem:[%s150] ss:$2 sm:$0xff] %v144
    %v152 = vld.sshfl [vmem:[#allocation1 + $0x10] sm:$0xff pattern:$0x75316420]
    %v153 = vld.sshfl [vmem:[#allocation1 + $0x18] sm:$0xff pattern:$0x75316420]
    %v158 = vsel %vm55, %v148, 0.0
    %v159 = vsel %vm55, %v152, 0.0
    %v160 = vadd.f32 %v158, %v159
    %v161 = vsel %vm55, %v149, 0.0
    %v162 = vsel %vm55, %v153, 0.0
    %v163 = vadd.f32 %v161, %v162
    %v164 = vsel %vm55, %v160, 0.0
    %v165 = vsel %vm55, %v163, 0.0
    %v166 = vadd.f32 %v164, %v165
    %167 = vadd.xlane.f32.xlu0 %v166
    %v168 = vpop.xlane.xlu0 %167
    %v169 = vld [vmem:[%s1] sm:$0xf]
    %v170 = vld [vmem:[%s2] sm:$0xf]
    %v171 = vld [vmem:[%s3] sm:$0xf]
    %v172 = vld [vmem:[%s4] sm:$0xf]
    %s173 = scalar_lea.vmem %s4, 4
    %v174 = vld [vmem:[%s173] sm:$0xf]
    %v175 = vmul.f32 %v66, 0.001953125
    %v176 = vmul.f32 %v90, 0.001953125
    %v177 = vmul.f32 %v116, 0.001953125
    %v178 = vmul.f32 %v175, %v175
    %v179 = vsub.f32 %v177, %v178
    %v180 = vadd.f32 %v179, 5e-06
    %v181 = vmul.f32 %v142, 0.001953125
    %v182 = vmul.f32 %v175, %v176
    %v183 = vsub.f32 %v181, %v182
    %v184 = vmul.f32 %v168, 0.001953125
    %v185 = vmul.f32 %v176, %v176
    %v186 = vsub.f32 %v184, %v185
    %v187 = vadd.f32 %v186, 5e-06
    %v188 = vadd.f32 %v180, %v187
    %v189 = vmul.f32 %v180, %v187
    %v190 = vmul.f32 %v183, %v183
    %v191 = vsub.f32 %v189, %v190
    %v192 = vrsqrt.pop %v191
    %v193 = vmul.f32 %v192, %v191
    %v194 = vmul.f32 %v193, %v192
    %v195 = vmul.f32 0.5, %v194
    %v196 = vsub.f32 1.5, %v195
    %v197 = vmul.f32 %v192, %v196
    %v198 = vmul.f32 %v191, %v197
    %vm199 = vcmp.eq.f32.partialorder %v191, inf
    %v200 = vsel %vm199, %v191, %v198
    %vm201 = vcmp.eq.f32.partialorder %v191, 0.0
    %v202 = vand.u32 %v191, 2147483648
    %v203 = vsel %vm201, %v202, %v200
    %v204 = vmul.f32 %v203, 2.0
    %v205 = vadd.f32 %v188, %v204
    %v206 = vrsqrt.pop %v205
    %v207 = vmul.f32 %v206, %v205
    %v208 = vmul.f32 %v207, %v206
    %v209 = vmul.f32 0.5, %v208
    %v210 = vsub.f32 1.5, %v209
    %v211 = vmul.f32 %v206, %v210
    %v212 = vmul.f32 %v205, %v211
    %vm213 = vcmp.eq.f32.partialorder %v205, inf
    %v214 = vsel %vm213, %v205, %v212
    %vm215 = vcmp.eq.f32.partialorder %v205, 0.0
    %v216 = vand.u32 %v205, 2147483648
    %v217 = vsel %vm215, %v216, %v214
    %v218 = vmul.f32 %v203, %v217
    %v219 = vrcp.pop %v218
    %v220 = vmul.f32 %v218, %v219
    %v221 = vsub.f32 1.0, %v220
    %v222 = vmul.f32 %v219, %v221
    %v223 = vadd.f32 %v219, %v222
    %vm224 = vweird.f32 %v218
    %vm225 = vweird.f32 %v219
    %vm226 = vmor %vm224, %vm225
    %v227 = vsel %vm226, %v219, %v223
    %v228 = vand.u32 2147483647, %v218
    %vm229 = vcmp.eq.f32.partialorder %v228, 8.507059e+37
    %v230 = vand.u32 %v218, 2147483648
    %v231 = vor.u32 1.1754944e-38, %v230
    %v232 = vsel %vm229, %v231, %v227
    %v233 = vmul.f32 1.0, %v232
    %v234 = vmul.f32 %v233, 0.70710677
    %v235 = vadd.f32 %v203, %v187
    %v236 = vmul.f32 %v235, %v234
    %v237 = vadd.f32 %v203, %v180
    %v238 = vmul.f32 %v237, %v234
    %v239 = vsub.f32 0.0, %v183
    %v240 = vmul.f32 %v239, %v234
    %v241 = vmul.f32 %v169, %v236
    %v242 = vmul.f32 %v170, %v240
    %v243 = vadd.f32 %v241, %v242
    %v244 = vmul.f32 %v169, %v240
    %v245 = vmul.f32 %v170, %v238
    %v246 = vadd.f32 %v244, %v245
    %v247 = vmul.f32 %v170, %v236
    %v248 = vmul.f32 %v171, %v240
    %v249 = vadd.f32 %v247, %v248
    %v250 = vmul.f32 %v171, %v238
    %v251 = vadd.f32 %v242, %v250
    %v252 = vmul.f32 %v243, %v175
    %v253 = vsub.f32 %v172, %v252
    %v254 = vmul.f32 %v246, %v176
    %v255 = vsub.f32 %v253, %v254
    %v256 = vmul.f32 %v249, %v175
    %v257 = vsub.f32 %v174, %v256
    %v258 = vmul.f32 %v251, %v176
    %v259 = vsub.f32 %v257, %v258
    %261 = vset.pattern.permute.xlu0 0
    %262 = vperm.xlu0 %261, %v243
    %v263 = vpop.permute.xlu0 %262
    %265 = vst [vmem:[#allocation1] ss:$2 sm:$0xff] %v37
    %v266 = vld.sshfl [vmem:[#allocation1] sm:$0xff pattern:$0x75316420]
    %v267 = vld.sshfl [vmem:[#allocation1 + $0x8] sm:$0xff pattern:$0x75316420]
    %s268 = scalar_lea.vmem [#allocation1], 16
    %269 = vst [vmem:[%s268] ss:$2 sm:$0xff] %v38
    %v270 = vld.sshfl [vmem:[#allocation1 + $0x10] sm:$0xff pattern:$0x75316420]
    %v271 = vld.sshfl [vmem:[#allocation1 + $0x18] sm:$0xff pattern:$0x75316420]
    %v276 = vmul.f32 %v263, %v266
    %v277 = vmul.f32 %v263, %v267
    %v278 = vmul.f32 %v263, %v270
    %v279 = vmul.f32 %v263, %v271
    %281 = vset.pattern.permute.xlu0 0
    %282 = vperm.xlu0 %281, %v246
    %v283 = vpop.permute.xlu0 %282
    %285 = vst [vmem:[#allocation1] ss:$2 sm:$0xff] %v40
    %v286 = vld.sshfl [vmem:[#allocation1] sm:$0xff pattern:$0x75316420]
    %v287 = vld.sshfl [vmem:[#allocation1 + $0x8] sm:$0xff pattern:$0x75316420]
    %s288 = scalar_lea.vmem [#allocation1], 16
    %289 = vst [vmem:[%s288] ss:$2 sm:$0xff] %v41
    %v290 = vld.sshfl [vmem:[#allocation1 + $0x10] sm:$0xff pattern:$0x75316420]
    %v291 = vld.sshfl [vmem:[#allocation1 + $0x18] sm:$0xff pattern:$0x75316420]
    %v296 = vmul.f32 %v283, %v286
    %v297 = vmul.f32 %v283, %v287
    %v298 = vmul.f32 %v283, %v290
    %v299 = vmul.f32 %v283, %v291
    %v300 = vadd.f32 %v276, %v296
    %v301 = vadd.f32 %v277, %v297
    %v302 = vadd.f32 %v278, %v298
    %v303 = vadd.f32 %v279, %v299
    %305 = vset.pattern.permute.xlu0 0
    %306 = vperm.xlu0 %305, %v255
    %v307 = vpop.permute.xlu0 %306
    %v309 = vadd.f32 %v300, %v307
    %v310 = vadd.f32 %v301, %v307
    %v311 = vadd.f32 %v302, %v307
    %v312 = vadd.f32 %v303, %v307
    %v317 = vrot.slane %v310, 4
    %v318 = vrot.slane %v312, 4
    %v319 = vsel %vm55, %v309, %v317
    %v320 = vsel %vm55, %v311, %v318
    %323 = vst [vmem:[#allocation5] sm:$0xff] %v319
    %324 = vst [vmem:[#allocation5 + $0x10] sm:$0xff] %v320
    %326 = vset.pattern.permute.xlu0 0
    %327 = vperm.xlu0 %326, %v249
    %v328 = vpop.permute.xlu0 %327
    %330 = vst [vmem:[#allocation1] ss:$2 sm:$0xff] %v37
    %v331 = vld.sshfl [vmem:[#allocation1] sm:$0xff pattern:$0x75316420]
    %v332 = vld.sshfl [vmem:[#allocation1 + $0x8] sm:$0xff pattern:$0x75316420]
    %s333 = scalar_lea.vmem [#allocation1], 16
    %334 = vst [vmem:[%s333] ss:$2 sm:$0xff] %v38
    %v335 = vld.sshfl [vmem:[#allocation1 + $0x10] sm:$0xff pattern:$0x75316420]
    %v336 = vld.sshfl [vmem:[#allocation1 + $0x18] sm:$0xff pattern:$0x75316420]
    %v341 = vmul.f32 %v328, %v331
    %v342 = vmul.f32 %v328, %v332
    %v343 = vmul.f32 %v328, %v335
    %v344 = vmul.f32 %v328, %v336
    %346 = vset.pattern.permute.xlu0 0
    %347 = vperm.xlu0 %346, %v251
    %v348 = vpop.permute.xlu0 %347
    %350 = vst [vmem:[#allocation1] ss:$2 sm:$0xff] %v40
    %v351 = vld.sshfl [vmem:[#allocation1] sm:$0xff pattern:$0x75316420]
    %v352 = vld.sshfl [vmem:[#allocation1 + $0x8] sm:$0xff pattern:$0x75316420]
    %s353 = scalar_lea.vmem [#allocation1], 16
    %354 = vst [vmem:[%s353] ss:$2 sm:$0xff] %v41
    %v355 = vld.sshfl [vmem:[#allocation1 + $0x10] sm:$0xff pattern:$0x75316420]
    %v356 = vld.sshfl [vmem:[#allocation1 + $0x18] sm:$0xff pattern:$0x75316420]
    %v361 = vmul.f32 %v348, %v351
    %v362 = vmul.f32 %v348, %v352
    %v363 = vmul.f32 %v348, %v355
    %v364 = vmul.f32 %v348, %v356
    %v365 = vadd.f32 %v341, %v361
    %v366 = vadd.f32 %v342, %v362
    %v367 = vadd.f32 %v343, %v363
    %v368 = vadd.f32 %v344, %v364
    %370 = vset.pattern.permute.xlu0 0
    %371 = vperm.xlu0 %370, %v259
    %v372 = vpop.permute.xlu0 %371
    %v374 = vadd.f32 %v365, %v372
    %v375 = vadd.f32 %v366, %v372
    %v376 = vadd.f32 %v367, %v372
    %v377 = vadd.f32 %v368, %v372
    %v382 = vrot.slane %v375, 4
    %v383 = vrot.slane %v377, 4
    %v384 = vsel %vm55, %v374, %v382
    %v385 = vsel %vm55, %v376, %v383
    %s388 = scalar_lea.vmem [#allocation5], 8
    %389 = vst [vmem:[%s388] sm:$0xff] %v384
    %390 = vst [vmem:[%s388 + $0x10] sm:$0xff] %v385
    // Predicated region
    $region26: #{tpu_custom_call.1} parent=1 // pred_check
      _
    $region27: #{tpu_custom_call.1} parent=1 // pred_check_branch
      %392 = sbr.rel (0) target = $region29
    $region28: #{tpu_custom_call.1} parent=1 // pred_region
      %394 = vsyncadd [#allocation4], 0
      %s395 = sshll.u32 [#allocation5], 4
      %s396 = int_to_ptr.vmem [resolvable:$true] %s395
      %s397 = sshll.u32 %s5, 4
      %s398 = int_to_ptr.hbm [resolvable:$true] %s397
      %403 = dma.vmem_to_hbm [thread:$0]  %s396, 512, %s398, [#allocation4], 128, 128, 8
    $region29: #{tpu_custom_call.1} parent=1 // pred_fallthru
      _
    // Predicated region
    $region30: #{tpu_custom_call.1} parent=1 // pred_check
      _
    $region31: #{tpu_custom_call.1} parent=1 // pred_check_branch
      %405 = sbr.rel (0) target = $region33
    $region32: #{tpu_custom_call.1} parent=1 // pred_region
      %407 = dma.done [#allocation4], 512
    $region33: #{tpu_custom_call.1} parent=1 // pred_fallthru
      _
    %408 = vsyncpa [#allocation3], 1
    %409 = vsyncpa [#allocation4], 1

</llo_original>
